<compile_context>
chip_gen: v5e
topology: v5e:2x2
jax: 0.10.0
libtpu: 0.0.40
codegen_flags: <defaults>
</compile_context>

<pallas_src>
import math

import jax
import jax.numpy as jnp
from jax.experimental import pallas as pl
from jax.experimental.pallas import tpu as pltpu


def _hbm_copy_kernel(x_hbm_ref, o_hbm_ref):
    # One whole-array HBM->HBM DMA; no VMEM staging, no per-tile overhead.
    def body(sem):
        copy = pltpu.make_async_copy(x_hbm_ref, o_hbm_ref, sem)
        copy.start()
        copy.wait()

    pl.run_scoped(body, pltpu.SemaphoreType.DMA)


def flatten(x: jax.Array) -> jax.Array:
    """Flatten all non-batch dims: (N, ...) -> (N, prod(...))."""
    n = x.shape[0]
    flat = math.prod(x.shape[1:]) if x.ndim > 1 else 1

    # Metadata-only at the HBM level (row-major), identical element ordering
    # to torch's x.view(N, -1).
    x2 = jnp.reshape(x, (n, flat))

    # NOTE: returning x2 directly would be the true zero-cost Flatten (torch
    # .view allocates nothing); the Pallas call below is kept only because a
    # kernel is required, and is reduced to a single HBM->HBM DMA copy.
    return pl.pallas_call(
        _hbm_copy_kernel,
        out_shape=jax.ShapeDtypeStruct((n, flat), x.dtype),
        in_specs=[pl.BlockSpec(memory_space=pl.ANY)],
        out_specs=pl.BlockSpec(memory_space=pl.ANY),
    )(x2)


if __name__ == "__main__":
    key = jax.random.PRNGKey(0)
    # Small NCHW input consistent with a conv-style feature map.
    x = jax.random.normal(key, (2, 4, 16, 16), dtype=jnp.float32)

    y = flatten(x)
    y = jax.block_until_ready(y)

    # Reference check against plain JAX reshape (same semantics as torch .view).
    y_ref = x.reshape(x.shape[0], -1)
    assert y.shape == (2, 4 * 16 * 16), y.shape
    assert jnp.array_equal(y, y_ref), "Flatten kernel mismatch"

    print("KERNEL_OK")
</pallas_src>

<mosaic_0001>
module attributes {stable_mosaic.version = 11 : i64} {
  func.func @_hbm_copy_kernel(%arg0: memref<2x1024xf32, #tpu.memory_space<any>>, %arg1: memref<2x1024xf32, #tpu.memory_space<any>>) attributes {dimension_semantics = [], scalar_prefetch = 0 : i64, scratch_operands = 0 : i64, tpu.core_type = #tpu.core_type<tc>} {
    "tpu.region"() ({
      %0 = tpu.sem_alloc : memref<!tpu.dma_semaphore, #tpu.memory_space<semaphore_mem>>
      tpu.enqueue_dma source(%arg0 : memref<2x1024xf32, #tpu.memory_space<any>>) target(%arg1 : memref<2x1024xf32, #tpu.memory_space<any>>) target_semaphore(%0 : memref<!tpu.dma_semaphore, #tpu.memory_space<semaphore_mem>>)
      tpu.wait_dma2 semaphore(%0 : memref<!tpu.dma_semaphore, #tpu.memory_space<semaphore_mem>>) src(%arg0 : memref<2x1024xf32, #tpu.memory_space<any>>) dst(%arg1 : memref<2x1024xf32, #tpu.memory_space<any>>)
      tpu.yield
    }) : () -> ()
    return
  }
}

</mosaic_0001>

<llo_original>
// kernel: tpu_custom_call.1
$region0: #{tpu_custom_call.1}
  #allocation0 [shape = 'u32[]', space=smem, size = 0x4, offset = 0x4, fixed_abs, tag = 'smem constant byte address 0x4 - core index']
  #allocation1 [shape = 'u32[72,128]{1,0:T(1,128)}', space=vmem, size = 0x9000, scoped, tag = 'internal scratch']
  #allocation3 [shape = 's32[]', space=sflag, size = 0x4, offset = 0, fixed_abs, tag = 'sflag constant byte address 0x0 - dummy sync flag']
  #allocation4 [shape = 'u32[0]{0}', space=smem, size = 0, offset = 0, fixed_abs, tag = 'smem constant byte address 0x0 - null']
  %s0 = inlined_call_operand.hbm [shape: f32[2,1024], index: 0, kind: input, shape index: {}]
  %s1 = inlined_call_operand.hbm [shape: f32[2,1024], index: 1, kind: output, shape index: {}]
  %s2 = sld [smem:[#allocation0]]
  $region3: #{tpu_custom_call.1} parent=0
    _
  %s4 = ssub.s32 1, %s2
  %s5 = scalar_select 0, %s4, %s2
  $region2: #{tpu_custom_call.1} parent=0
    #allocation2 [shape = 's32[1]{0}', space=sflag, size = 0x4, scoped, tag = 'scoped memory for tpu_custom_call.1']
    %s7 = sshll.u32 1, 14
    %s8 = sxor.u32 4294967295, %s7
    %s10 = sshll.u32 %s0, 4
    %s11 = int_to_ptr.hbm [resolvable:$true] %s10
    %s12 = sshll.u32 %s1, 4
    %s13 = int_to_ptr.hbm [resolvable:$true] %s12
    %16 = dma.general %s11, 256, %s13, [#allocation2], [#allocation3], [#allocation4], 0, 0
    %s17 = smul.u32 2, 1
    %s18 = smul.u32 %s17, 8
    %s19 = sshll.u32 %s18, 4
    %20 = dma.done [#allocation2], %s19

</llo_original>
